<compile_context>
chip_gen: v7x
topology: tpu7x:2x2x1
jax: 0.10.0
libtpu: 0.0.40
codegen_flags: <defaults>
</compile_context>

<pallas_src>
import jax
import jax.numpy as jnp
from jax.experimental import pallas as pl
from jax.experimental.pallas import tpu as pltpu


def soundlenet_kernel(onehot_ref, img_ref, smean_ref, w1i_ref, c2h_ref,
                      b1_ref, w2_ref, b2_ref,
                      x_ref, f_ref, f1_ref, sf_ref):
    onehot = onehot_ref[...]                       # (Bt, n_cls)  compute dtype
    img = img_ref[...]                             # (Bt, 160)    compute dtype
    img_d = img.shape[1]

    # sound_feature[i] = sound_mean[label[i]]  (one-hot gather on the MXU)
    sound = jnp.dot(onehot, smean_ref[...],
                    preferred_element_type=jnp.float32)        # (Bt, 320) f32
    sf_ref[...] = sound

    # f = cat([img_feature, sound_feature], dim=1) -- written as two slice
    # stores, no (B,480) concat is assembled in vregs before the matmul.
    f_ref[:, :img_d] = img.astype(jnp.float32)
    f_ref[:, img_d:] = sound

    # TODO(synk): 'fc1' noise branch (softplus(encoder(...)['fc1']) + x) omitted.

    # fc1 with the pre-split weight; the sound half uses the precomputed
    # (n_cls, 64) class_to_hidden table instead of a Bx320x64 contraction.
    h = (jnp.dot(img, w1i_ref[...], preferred_element_type=jnp.float32)
         + jnp.dot(onehot, c2h_ref[...], preferred_element_type=jnp.float32)
         + b1_ref[...])
    h = jnp.maximum(h, 0.0)                                    # relu, (Bt, 64)
    f1_ref[...] = h

    # TODO(synk): 'fc2' noise branch (softplus(encoder(...)['fc2']) + x) omitted.

    # dropout = eval-mode identity; x = fc2(x)
    out = jnp.dot(h.astype(w2_ref.dtype), w2_ref[...],
                  preferred_element_type=jnp.float32) + b2_ref[...]
    x_ref[...] = out                                           # (Bt, 10) f32


def _round_up(x, m):
    return (x + m - 1) // m * m


def soundlenet_forward(label, img_feature, sound_mean, w1, b1, w2, b2,
                       *, compute_dtype=jnp.bfloat16, block_b=None):
    """label: (B,) int; img_feature: (B,160) f32; sound_mean: (10,320) f32;
    w1: (480,64); b1: (64,); w2: (64,10); b2: (10,).
    Returns (x, f, f1, sound_feature) as f32."""
    B, img_d = img_feature.shape
    n_cls, snd_d = sound_mean.shape
    hid = w1.shape[1]
    out_d = w2.shape[1]

    # ---- wrapper-side prep (tiny, fused XLA ops, done once per call) -------
    onehot = jax.nn.one_hot(label, n_cls, dtype=compute_dtype)     # (B, n_cls)
    img_c = img_feature.astype(compute_dtype)

    w1_img = w1[:img_d].astype(compute_dtype)                      # (160, 64)
    w1_snd = w1[img_d:].astype(compute_dtype)                      # (320, 64)
    smean_c = sound_mean.astype(compute_dtype)                     # (10, 320)
    # Fold the sound path of fc1 into a (n_cls, hid) table.
    c2h = jnp.dot(smean_c.astype(jnp.float32),
                  w1_snd.astype(jnp.float32)).astype(compute_dtype)  # (10, 64)
    w2_c = w2.astype(compute_dtype)
    b1_2d = b1.reshape(1, hid).astype(jnp.float32)
    b2_2d = b2.reshape(1, out_d).astype(jnp.float32)

    # ---- batch tiling -------------------------------------------------------
    sub = 16 if compute_dtype == jnp.bfloat16 else 8
    if block_b is None:
        if B >= 512:
            block_b = 512              # ~4 MiB/tile double-buffered, big DMAs
        elif B >= 256:
            block_b = 256
        else:
            block_b = _round_up(B, sub)
    block_b = _round_up(block_b, sub)
    b_pad = _round_up(B, block_b)
    if b_pad != B:
        pad = ((0, b_pad - B), (0, 0))
        onehot = jnp.pad(onehot, pad)
        img_c = jnp.pad(img_c, pad)
    num_tiles = b_pad // block_b

    def row_spec(d):
        return pl.BlockSpec((block_b, d), lambda i: (i, 0))

    def const_spec(shape):
        return pl.BlockSpec(shape, lambda i: (0, 0))

    grid_spec = pltpu.PrefetchScalarGridSpec(
        num_scalar_prefetch=0,
        grid=(num_tiles,),
        in_specs=[
            row_spec(n_cls),               # onehot          (batch tiled)
            row_spec(img_d),               # img_feature     (batch tiled)
            const_spec((n_cls, snd_d)),    # sound_mean      (VMEM resident)
            const_spec((img_d, hid)),      # w1_img          (VMEM resident)
            const_spec((n_cls, hid)),      # class_to_hidden (VMEM resident)
            const_spec((1, hid)),          # b1
            const_spec((hid, out_d)),      # w2
            const_spec((1, out_d)),        # b2
        ],
        out_specs=[
            row_spec(out_d),               # x (logits)
            row_spec(img_d + snd_d),       # f
            row_spec(hid),                 # f1
            row_spec(snd_d),               # sound_feature
        ],
    )

    out_shapes = (
        jax.ShapeDtypeStruct((b_pad, out_d), jnp.float32),
        jax.ShapeDtypeStruct((b_pad, img_d + snd_d), jnp.float32),
        jax.ShapeDtypeStruct((b_pad, hid), jnp.float32),
        jax.ShapeDtypeStruct((b_pad, snd_d), jnp.float32),
    )

    x, f, f1, sf = pl.pallas_call(
        soundlenet_kernel,
        out_shape=out_shapes,
        grid_spec=grid_spec,
        compiler_params=pltpu.CompilerParams(
            dimension_semantics=("parallel",)),
    )(onehot, img_c, smean_c, w1_img, c2h, b1_2d, w2_c, b2_2d)

    if b_pad != B:
        x, f, f1, sf = x[:B], f[:B], f1[:B], sf[:B]
    return x, f, f1, sf


def _reference(label, img_feature, sound_mean, w1, b1, w2, b2,
               compute_dtype=jnp.bfloat16):
    # Mirrors the kernel's low-precision operand rounding so tolerances stay
    # tight while checking the same forward semantics as the PyTorch module
    # (mode='one', noise/encoder omitted, dropout in eval mode).
    f32 = jnp.float32
    img = img_feature.astype(compute_dtype).astype(f32)
    sm = sound_mean.astype(compute_dtype).astype(f32)
    w1c = w1.astype(compute_dtype).astype(f32)
    w2c = w2.astype(compute_dtype).astype(f32)
    sound = sm[label]                                          # (B, 320)
    f = jnp.concatenate([img, sound], axis=1)                  # (B, 480)
    f1 = jnp.maximum(f @ w1c + b1, 0.0)                        # (B, 64)
    x = f1 @ w2c + b2                                          # (B, 10)
    return x, f, f1, sound


if __name__ == "__main__":
    key = jax.random.PRNGKey(0)
    k_lbl, k_img, k_snd, k_w1, k_b1, k_w2, k_b2 = jax.random.split(key, 7)

    B, IMG_D, SND_D, N_CLS = 8, 160, 320, 10
    HID, OUT = 64, 10

    label = jax.random.randint(k_lbl, (B,), 0, N_CLS, dtype=jnp.int32)
    img_feature = jax.random.normal(k_img, (B, IMG_D), dtype=jnp.float32)
    sound_mean = jax.random.normal(k_snd, (N_CLS, SND_D), dtype=jnp.float32)

    # fc1: Linear(480, 64), fc2: Linear(64, 10) -- stored as (in, out)
    w1 = jax.random.normal(k_w1, (IMG_D + SND_D, HID), dtype=jnp.float32) * 0.05
    b1 = jax.random.normal(k_b1, (HID,), dtype=jnp.float32) * 0.05
    w2 = jax.random.normal(k_w2, (HID, OUT), dtype=jnp.float32) * 0.05
    b2 = jax.random.normal(k_b2, (OUT,), dtype=jnp.float32) * 0.05

    outs = soundlenet_forward(label, img_feature, sound_mean, w1, b1, w2, b2)
    outs = jax.block_until_ready(outs)

    refs = _reference(label, img_feature, sound_mean, w1, b1, w2, b2)
    # (x, f, f1, sound_feature): bf16-matmul outputs get a looser tolerance,
    # the pure data-movement outputs must match (near-)exactly.
    tols = (5e-2, 1e-4, 5e-2, 1e-4)
    for got, ref, tol in zip(outs, refs, tols):
        assert got.shape == ref.shape and got.dtype == ref.dtype
        err = float(jnp.max(jnp.abs(got - ref)))
        assert jnp.allclose(got, ref, atol=tol, rtol=tol), err

    print("KERNEL_OK")
</pallas_src>

<mosaic_0001>
module attributes {stable_mosaic.version = 11 : i64} {
  func.func @soundlenet_kernel(%arg0: i32, %arg1: memref<16x10xbf16, #tpu.memory_space<vmem>>, %arg2: memref<16x160xbf16, #tpu.memory_space<vmem>>, %arg3: memref<10x320xbf16, #tpu.memory_space<vmem>>, %arg4: memref<160x64xbf16, #tpu.memory_space<vmem>>, %arg5: memref<10x64xbf16, #tpu.memory_space<vmem>>, %arg6: memref<1x64xf32, #tpu.memory_space<vmem>>, %arg7: memref<64x10xbf16, #tpu.memory_space<vmem>>, %arg8: memref<1x10xf32, #tpu.memory_space<vmem>>, %arg9: memref<16x10xf32, #tpu.memory_space<vmem>>, %arg10: memref<16x480xf32, #tpu.memory_space<vmem>>, %arg11: memref<16x64xf32, #tpu.memory_space<vmem>>, %arg12: memref<16x320xf32, #tpu.memory_space<vmem>>) attributes {dimension_semantics = [#tpu.dimension_semantics<parallel>], iteration_bounds = array<i64: 1>, scalar_prefetch = 0 : i64, scratch_operands = 0 : i64, tpu.core_type = #tpu.core_type<tc>, window_params = [{transform_indices = @transform_0, window_bounds = array<i64: 16, 10>}, {transform_indices = @transform_1, window_bounds = array<i64: 16, 160>}, {pipeline_mode = #tpu.pipeline_mode<synchronous>, transform_indices = @transform_2, window_bounds = array<i64: 10, 320>}, {pipeline_mode = #tpu.pipeline_mode<synchronous>, transform_indices = @transform_3, window_bounds = array<i64: 160, 64>}, {pipeline_mode = #tpu.pipeline_mode<synchronous>, transform_indices = @transform_4, window_bounds = array<i64: 10, 64>}, {pipeline_mode = #tpu.pipeline_mode<synchronous>, transform_indices = @transform_5, window_bounds = array<i64: 1, 64>}, {pipeline_mode = #tpu.pipeline_mode<synchronous>, transform_indices = @transform_6, window_bounds = array<i64: 64, 10>}, {pipeline_mode = #tpu.pipeline_mode<synchronous>, transform_indices = @transform_7, window_bounds = array<i64: 1, 10>}, {transform_indices = @transform_8, window_bounds = array<i64: 16, 10>}, {transform_indices = @transform_9, window_bounds = array<i64: 16, 480>}, {transform_indices = @transform_10, window_bounds = array<i64: 16, 64>}, {transform_indices = @transform_11, window_bounds = array<i64: 16, 320>}]} {
    %c0 = arith.constant 0 : index
    %c0_0 = arith.constant 0 : index
    %0 = vector.load %arg1[%c0, %c0_0] : memref<16x10xbf16, #tpu.memory_space<vmem>>, vector<16x10xbf16>
    %c0_1 = arith.constant 0 : index
    %c0_2 = arith.constant 0 : index
    %1 = vector.load %arg2[%c0_1, %c0_2] : memref<16x160xbf16, #tpu.memory_space<vmem>>, vector<16x160xbf16>
    %c0_3 = arith.constant 0 : index
    %c0_4 = arith.constant 0 : index
    %2 = vector.load %arg3[%c0_3, %c0_4] : memref<10x320xbf16, #tpu.memory_space<vmem>>, vector<10x320xbf16>
    %cst = arith.constant dense<0.000000e+00> : vector<16x320xf32>
    %3 = tpu.matmul %0, %2, %cst {dimension_numbers = #tpu.dot_dimension_numbers<[1], [0], [0], [1], [0, 0, 1, 1], [], []>} : vector<16x10xbf16>, vector<10x320xbf16>, vector<16x320xf32> -> vector<16x320xf32>
    %c0_5 = arith.constant 0 : index
    %c0_6 = arith.constant 0 : index
    %4 = vector.load %arg12[%c0_5, %c0_6] : memref<16x320xf32, #tpu.memory_space<vmem>>, vector<16x320xf32>
    tpu.vector_store %arg12[%c0_5, %c0_6], %3 {strides = array<i32>} : memref<16x320xf32, #tpu.memory_space<vmem>>, vector<16x320xf32>,
    %5 = arith.extf %1 : vector<16x160xbf16> to vector<16x160xf32>
    %c0_7 = arith.constant 0 : index
    %c0_8 = arith.constant 0 : index
    %6 = vector.load %arg10[%c0_7, %c0_8] : memref<16x480xf32, #tpu.memory_space<vmem>>, vector<16x160xf32>
    tpu.vector_store %arg10[%c0_7, %c0_8], %5 {strides = array<i32>} : memref<16x480xf32, #tpu.memory_space<vmem>>, vector<16x160xf32>,
    %c0_9 = arith.constant 0 : index
    %c160 = arith.constant 160 : index
    %7 = vector.load %arg10[%c0_9, %c160] : memref<16x480xf32, #tpu.memory_space<vmem>>, vector<16x320xf32>
    tpu.vector_store %arg10[%c0_9, %c160], %3 {strides = array<i32>} : memref<16x480xf32, #tpu.memory_space<vmem>>, vector<16x320xf32>,
    %c0_10 = arith.constant 0 : index
    %c0_11 = arith.constant 0 : index
    %8 = vector.load %arg4[%c0_10, %c0_11] : memref<160x64xbf16, #tpu.memory_space<vmem>>, vector<160x64xbf16>
    %cst_12 = arith.constant dense<0.000000e+00> : vector<16x64xf32>
    %9 = tpu.matmul %1, %8, %cst_12 {dimension_numbers = #tpu.dot_dimension_numbers<[1], [0], [0], [1], [0, 0, 1, 1], [], []>} : vector<16x160xbf16>, vector<160x64xbf16>, vector<16x64xf32> -> vector<16x64xf32>
    %c0_13 = arith.constant 0 : index
    %c0_14 = arith.constant 0 : index
    %10 = vector.load %arg5[%c0_13, %c0_14] : memref<10x64xbf16, #tpu.memory_space<vmem>>, vector<10x64xbf16>
    %cst_15 = arith.constant dense<0.000000e+00> : vector<16x64xf32>
    %11 = tpu.matmul %0, %10, %cst_15 {dimension_numbers = #tpu.dot_dimension_numbers<[1], [0], [0], [1], [0, 0, 1, 1], [], []>} : vector<16x10xbf16>, vector<10x64xbf16>, vector<16x64xf32> -> vector<16x64xf32>
    %12 = arith.addf %9, %11 : vector<16x64xf32>
    %c0_16 = arith.constant 0 : index
    %c0_17 = arith.constant 0 : index
    %13 = vector.load %arg6[%c0_16, %c0_17] : memref<1x64xf32, #tpu.memory_space<vmem>>, vector<1x64xf32>
    %14 = vector.broadcast %13 : vector<1x64xf32> to vector<16x64xf32>
    %15 = arith.addf %12, %14 : vector<16x64xf32>
    %cst_18 = arith.constant 0.000000e+00 : f32
    %16 = vector.broadcast %cst_18 : f32 to vector<16x64xf32>
    %17 = arith.maximumf %15, %16 : vector<16x64xf32>
    %c0_19 = arith.constant 0 : index
    %c0_20 = arith.constant 0 : index
    %18 = vector.load %arg11[%c0_19, %c0_20] : memref<16x64xf32, #tpu.memory_space<vmem>>, vector<16x64xf32>
    tpu.vector_store %arg11[%c0_19, %c0_20], %17 {strides = array<i32>} : memref<16x64xf32, #tpu.memory_space<vmem>>, vector<16x64xf32>,
    %19 = arith.truncf %17 : vector<16x64xf32> to vector<16x64xbf16>
    %c0_21 = arith.constant 0 : index
    %c0_22 = arith.constant 0 : index
    %20 = vector.load %arg7[%c0_21, %c0_22] : memref<64x10xbf16, #tpu.memory_space<vmem>>, vector<64x10xbf16>
    %cst_23 = arith.constant dense<0.000000e+00> : vector<16x10xf32>
    %21 = tpu.matmul %19, %20, %cst_23 {dimension_numbers = #tpu.dot_dimension_numbers<[1], [0], [0], [1], [0, 0, 1, 1], [], []>} : vector<16x64xbf16>, vector<64x10xbf16>, vector<16x10xf32> -> vector<16x10xf32>
    %c0_24 = arith.constant 0 : index
    %c0_25 = arith.constant 0 : index
    %22 = vector.load %arg8[%c0_24, %c0_25] : memref<1x10xf32, #tpu.memory_space<vmem>>, vector<1x10xf32>
    %23 = vector.broadcast %22 : vector<1x10xf32> to vector<16x10xf32>
    %24 = arith.addf %21, %23 : vector<16x10xf32>
    %c0_26 = arith.constant 0 : index
    %c0_27 = arith.constant 0 : index
    %25 = vector.load %arg9[%c0_26, %c0_27] : memref<16x10xf32, #tpu.memory_space<vmem>>, vector<16x10xf32>
    tpu.vector_store %arg9[%c0_26, %c0_27], %24 {strides = array<i32>} : memref<16x10xf32, #tpu.memory_space<vmem>>, vector<16x10xf32>,
    return
  }
  func.func @transform_0(%arg0: i32) -> (i32, i32) {
    %c0_i32 = arith.constant 0 : i32
    %c0_i32_0 = arith.constant 0 : i32
    return %arg0, %c0_i32 : i32, i32
  }
  func.func @transform_1(%arg0: i32) -> (i32, i32) {
    %c0_i32 = arith.constant 0 : i32
    %c0_i32_0 = arith.constant 0 : i32
    return %arg0, %c0_i32 : i32, i32
  }
  func.func @transform_2(%arg0: i32) -> (i32, i32) {
    %c0_i32 = arith.constant 0 : i32
    %c0_i32_0 = arith.constant 0 : i32
    %c0_i32_1 = arith.constant 0 : i32
    return %c0_i32, %c0_i32_0 : i32, i32
  }
  func.func @transform_3(%arg0: i32) -> (i32, i32) {
    %c0_i32 = arith.constant 0 : i32
    %c0_i32_0 = arith.constant 0 : i32
    %c0_i32_1 = arith.constant 0 : i32
    return %c0_i32, %c0_i32_0 : i32, i32
  }
  func.func @transform_4(%arg0: i32) -> (i32, i32) {
    %c0_i32 = arith.constant 0 : i32
    %c0_i32_0 = arith.constant 0 : i32
    %c0_i32_1 = arith.constant 0 : i32
    return %c0_i32, %c0_i32_0 : i32, i32
  }
  func.func @transform_5(%arg0: i32) -> (i32, i32) {
    %c0_i32 = arith.constant 0 : i32
    %c0_i32_0 = arith.constant 0 : i32
    %c0_i32_1 = arith.constant 0 : i32
    return %c0_i32, %c0_i32_0 : i32, i32
  }
  func.func @transform_6(%arg0: i32) -> (i32, i32) {
    %c0_i32 = arith.constant 0 : i32
    %c0_i32_0 = arith.constant 0 : i32
    %c0_i32_1 = arith.constant 0 : i32
    return %c0_i32, %c0_i32_0 : i32, i32
  }
  func.func @transform_7(%arg0: i32) -> (i32, i32) {
    %c0_i32 = arith.constant 0 : i32
    %c0_i32_0 = arith.constant 0 : i32
    %c0_i32_1 = arith.constant 0 : i32
    return %c0_i32, %c0_i32_0 : i32, i32
  }
  func.func @transform_8(%arg0: i32) -> (i32, i32) {
    %c0_i32 = arith.constant 0 : i32
    %c0_i32_0 = arith.constant 0 : i32
    return %arg0, %c0_i32 : i32, i32
  }
  func.func @transform_9(%arg0: i32) -> (i32, i32) {
    %c0_i32 = arith.constant 0 : i32
    %c0_i32_0 = arith.constant 0 : i32
    return %arg0, %c0_i32 : i32, i32
  }
  func.func @transform_10(%arg0: i32) -> (i32, i32) {
    %c0_i32 = arith.constant 0 : i32
    %c0_i32_0 = arith.constant 0 : i32
    return %arg0, %c0_i32 : i32, i32
  }
  func.func @transform_11(%arg0: i32) -> (i32, i32) {
    %c0_i32 = arith.constant 0 : i32
    %c0_i32_0 = arith.constant 0 : i32
    return %arg0, %c0_i32 : i32, i32
  }
}

</mosaic_0001>

<llo_original>
// kernel: tpu_custom_call.1
$region0: #{tpu_custom_call.1}
  #allocation0 [shape = 'u32[]', space=smem, size = 0x4, offset = 0x4, fixed_abs, tag = 'smem constant byte address 0x4 - core index']
  #allocation1 [shape = 'u32[144,128]{1,0:T(1,128)}', space=vmem, size = 0x12000, scoped, tag = 'internal scratch']
  %s0 = inlined_call_operand.vmem [shape: bf16[16,10], index: 0, kind: input, shape index: {}]
  %s1 = inlined_call_operand.vmem [shape: bf16[16,160], index: 1, kind: input, shape index: {}]
  %s2 = inlined_call_operand.vmem [shape: bf16[10,320], index: 2, kind: input, shape index: {}]
  %s3 = inlined_call_operand.vmem [shape: bf16[160,64], index: 3, kind: input, shape index: {}]
  %s4 = inlined_call_operand.vmem [shape: bf16[10,64], index: 4, kind: input, shape index: {}]
  %s5 = inlined_call_operand.vmem [shape: f32[1,64], index: 5, kind: input, shape index: {}]
  %s6 = inlined_call_operand.vmem [shape: bf16[64,10], index: 6, kind: input, shape index: {}]
  %s7 = inlined_call_operand.vmem [shape: f32[1,10], index: 7, kind: input, shape index: {}]
  %s8 = inlined_call_operand.hbm [shape: f32[16,10], index: 8, kind: output, shape index: {0}]
  %s9 = inlined_call_operand.hbm [shape: f32[16,480], index: 9, kind: output, shape index: {1}]
  %s10 = inlined_call_operand.hbm [shape: f32[16,64], index: 10, kind: output, shape index: {2}]
  %s11 = inlined_call_operand.hbm [shape: f32[16,320], index: 11, kind: output, shape index: {3}]
  %12 = xla_tuple %s8, %s9, %s10, %s11
  %s13 = sld [smem:[#allocation0]]
  $region66: #{tpu_custom_call.1} parent=0
    _
  %s15 = ssub.s32 1, %s13
  %s16 = scalar_select 0, %s15, %s13
  $region1: #{tpu_custom_call.1} parent=0
    #allocation2 [shape = 'u8[8192]{0}', space=vmem, size = 0x2000, scoped, tag = 'output window, operand 0, single buffered']
    #allocation3 [shape = 's32[1]{0}', space=sflag, size = 0x4, scoped, tag = 'scoped memory for tpu_custom_call.1']
    #allocation4 [shape = 'u8[32768]{0}', space=vmem, size = 0x8000, scoped, tag = 'output window, operand 1, single buffered']
    #allocation5 [shape = 's32[1]{0}', space=sflag, size = 0x4, scoped, tag = 'scoped memory for tpu_custom_call.1']
    #allocation6 [shape = 'u8[8192]{0}', space=vmem, size = 0x2000, scoped, tag = 'output window, operand 2, single buffered']
    #allocation7 [shape = 'u8[24576]{0}', space=vmem, size = 0x6000, scoped, tag = 'output window, operand 3, single buffered']
    #allocation8 [shape = 's32[1]{0}', space=sflag, size = 0x4, scoped, tag = 'scoped memory for tpu_custom_call.1']
    %17 = vsyncpa [#allocation3], 0
    %18 = vsyncpa [#allocation5], 0
    %19 = vsyncpa [#allocation8], 0
    // Predicated region
    $region2: #{tpu_custom_call.1} parent=1 // pred_check
      _
    $region3: #{tpu_custom_call.1} parent=1 // pred_check_branch
      %21 = sbr.rel (0) target = $region5
    $region4: #{tpu_custom_call.1} parent=1 // pred_region
      _
    $region5: #{tpu_custom_call.1} parent=1 // pred_fallthru
      _
    // Predicated region
    $region6: #{tpu_custom_call.1} parent=1 // pred_check
      _
    $region7: #{tpu_custom_call.1} parent=1 // pred_check_branch
      %23 = sbr.rel (0) target = $region9
    $region8: #{tpu_custom_call.1} parent=1 // pred_region
      _
    $region9: #{tpu_custom_call.1} parent=1 // pred_fallthru
      _
    // Predicated region
    $region10: #{tpu_custom_call.1} parent=1 // pred_check
      _
    $region11: #{tpu_custom_call.1} parent=1 // pred_check_branch
      %25 = sbr.rel (0) target = $region13
    $region12: #{tpu_custom_call.1} parent=1 // pred_region
      _
    $region13: #{tpu_custom_call.1} parent=1 // pred_fallthru
      _
    // Predicated region
    $region14: #{tpu_custom_call.1} parent=1 // pred_check
      _
    $region15: #{tpu_custom_call.1} parent=1 // pred_check_branch
      %27 = sbr.rel (0) target = $region17
    $region16: #{tpu_custom_call.1} parent=1 // pred_region
      _
    $region17: #{tpu_custom_call.1} parent=1 // pred_fallthru
      _
    // Predicated region
    $region18: #{tpu_custom_call.1} parent=1 // pred_check
      _
    $region19: #{tpu_custom_call.1} parent=1 // pred_check_branch
      %29 = sbr.rel (0) target = $region21
    $region20: #{tpu_custom_call.1} parent=1 // pred_region
      _
    $region21: #{tpu_custom_call.1} parent=1 // pred_fallthru
      _
    // Predicated region
    $region22: #{tpu_custom_call.1} parent=1 // pred_check
      _
    $region23: #{tpu_custom_call.1} parent=1 // pred_check_branch
      %31 = sbr.rel (0) target = $region25
    $region24: #{tpu_custom_call.1} parent=1 // pred_region
      _
    $region25: #{tpu_custom_call.1} parent=1 // pred_fallthru
      _
    // Predicated region
    $region26: #{tpu_custom_call.1} parent=1 // pred_check
      _
    $region27: #{tpu_custom_call.1} parent=1 // pred_check_branch
      %33 = sbr.rel (0) target = $region29
    $region28: #{tpu_custom_call.1} parent=1 // pred_region
      _
    $region29: #{tpu_custom_call.1} parent=1 // pred_fallthru
      _
    // Predicated region
    $region30: #{tpu_custom_call.1} parent=1 // pred_check
      _
    $region31: #{tpu_custom_call.1} parent=1 // pred_check_branch
      %35 = sbr.rel (0) target = $region33
    $region32: #{tpu_custom_call.1} parent=1 // pred_region
      _
    $region33: #{tpu_custom_call.1} parent=1 // pred_fallthru
      _
    %v37 = vld [vmem:[%s0] sm:$0xf]
    %v38 = vld [vmem:[%s0 + $0x4] sm:$0xf]
    %v39 = vld [vmem:[%s1] sm:$0xff]
    %v40 = vld [vmem:[%s1 + $0x8] sm:$0xff]
    %v41 = vld [vmem:[%s2] sm:$0xff]
    %v42 = vld [vmem:[%s2 + $0x8] sm:$0xf]
    %v43 = vld [vmem:[%s2 + $0xc] sm:$0x11]
    %v44 = vld [vmem:[%s2 + $0x14] sm:$0x1]
    %v47 = vunpack.c.l.b16 %v37
    %v48 = vunpack.c.l.b16 %v38
    %v49 = vpack.c.b16 %v48, %v47
    %v54 = vunpack.c.l.b16 %v41
    %v55 = vunpack.c.h.b16 %v41
    %v56 = vunpack.c.l.b16 %v42
    %v57 = vunpack.c.l.b16 %v43
    %v58 = vunpack.c.h.b16 %v43
    %v59 = vunpack.c.l.b16 %v44
    %v60 = vpack.c.b16 %v57, %v54
    %v61 = vpack.c.b16 %v58, %v55
    %v62 = vpack.c.b16 %v59, %v56
    %vm63 = vcmask 80896
    %v65 = vsel %vm63, %v49, 0
    %vm67 = vcmask 1044480
    %v69 = vsel %vm67, %v60, 0
    %v72 = vsel %vm67, %v61, 0
    %v75 = vsel %vm67, %v62, 0
    %77 = vmatprep.subr.bf16.mxu0 %v72
    %78 = vmatpush1.bf16.msra.mxu0 %v69
    %79 = vmatprep.subr.bf16.mxu0 0
    %80 = vmatpush1.bf16.msra.mxu0 0
    %81 = vmatprep.subr.bf16.mxu0 0
    %82 = vmatpush1.bf16.msra.mxu0 0
    %83 = vmatprep.subr.bf16.mxu0 0
    %84 = vmatpush1.bf16.msra.mxu0 0
    %85 = vmatprep.subr.bf16.mxu0 0
    %86 = vmatpush1.bf16.msra.mxu0 0
    %87 = vmatprep.subr.bf16.mxu0 0
    %88 = vmatpush1.bf16.msra.mxu0 0
    %89 = vmatprep.subr.bf16.mxu0 0
    %90 = vmatpush1.bf16.msra.mxu0 0
    %91 = vmatprep.subr.bf16.mxu0 0
    %92 = vmatpush1.bf16.msra.mxu0 0
    %93 = vmatprep.subr.bf16.mxu0 0
    %94 = vmatpush1.bf16.msra.mxu0 0
    %95 = vmatprep.subr.bf16.mxu0 0
    %96 = vmatpush1.bf16.msra.mxu0 0
    %97 = vmatprep.subr.bf16.mxu0 0
    %98 = vmatpush1.bf16.msra.mxu0 0
    %99 = vmatprep.subr.bf16.mxu0 0
    %100 = vmatpush1.bf16.msra.mxu0 0
    %101 = vmatprep.subr.bf16.mxu0 0
    %102 = vmatpush1.bf16.msra.mxu0 0
    %103 = vmatprep.subr.bf16.mxu0 0
    %104 = vmatpush1.bf16.msra.mxu0 0
    %105 = vmatprep.subr.bf16.mxu0 0
    %106 = vmatpush1.bf16.msra.mxu0 0
    %107 = vmatprep.subr.bf16.mxu0 0
    %108 = vmatpush1.bf16.msra.mxu0 0
    %109 = vmatprep.mubr.bf16.mxu0 0
    %110 = vmatmul.mubr.bf16.gmra.mrb[0].mxu0 %v65
    %v111 = vpop.f32.mrb[0].mxu0
    %v112 = vadd.f32 0.0, %v111
    %v113 = vpop.f32.mrb[0].mxu0
    %v114 = vadd.f32 0.0, %v113
    %v115 = vpop.f32.mrb[0].mxu0
    %v116 = vadd.f32 0.0, %v115
    %v117 = vpop.f32.mrb[0].mxu0
    %v118 = vadd.f32 0.0, %v117
    %119 = vdwg.mxu0
    %120 = vmatprep.subr.bf16.mxu0 0
    %121 = vmatpush1.bf16.msra.mxu0 %v75
    %122 = vmatprep.subr.bf16.mxu0 0
    %123 = vmatpush1.bf16.msra.mxu0 0
    %124 = vmatprep.subr.bf16.mxu0 0
    %125 = vmatpush1.bf16.msra.mxu0 0
    %126 = vmatprep.subr.bf16.mxu0 0
    %127 = vmatpush1.bf16.msra.mxu0 0
    %128 = vmatprep.subr.bf16.mxu0 0
    %129 = vmatpush1.bf16.msra.mxu0 0
    %130 = vmatprep.subr.bf16.mxu0 0
    %131 = vmatpush1.bf16.msra.mxu0 0
    %132 = vmatprep.subr.bf16.mxu0 0
    %133 = vmatpush1.bf16.msra.mxu0 0
    %134 = vmatprep.subr.bf16.mxu0 0
    %135 = vmatpush1.bf16.msra.mxu0 0
    %136 = vmatprep.subr.bf16.mxu0 0
    %137 = vmatpush1.bf16.msra.mxu0 0
    %138 = vmatprep.subr.bf16.mxu0 0
    %139 = vmatpush1.bf16.msra.mxu0 0
    %140 = vmatprep.subr.bf16.mxu0 0
    %141 = vmatpush1.bf16.msra.mxu0 0
    %142 = vmatprep.subr.bf16.mxu0 0
    %143 = vmatpush1.bf16.msra.mxu0 0
    %144 = vmatprep.subr.bf16.mxu0 0
    %145 = vmatpush1.bf16.msra.mxu0 0
    %146 = vmatprep.subr.bf16.mxu0 0
    %147 = vmatpush1.bf16.msra.mxu0 0
    %148 = vmatprep.subr.bf16.mxu0 0
    %149 = vmatpush1.bf16.msra.mxu0 0
    %150 = vmatprep.subr.bf16.mxu0 0
    %151 = vmatpush1.bf16.msra.mxu0 0
    %152 = vmatprep.mubr.bf16.mxu0 0
    %153 = vmatmul.mubr.bf16.gmra.mrb[0].mxu0 %v65
    %v154 = vpop.f32.mrb[0].mxu0
    %v155 = vadd.f32 0.0, %v154
    %v156 = vpop.f32.mrb[0].mxu0
    %v157 = vpop.f32.mrb[0].mxu0
    %v158 = vadd.f32 0.0, %v157
    %v159 = vpop.f32.mrb[0].mxu0
    %160 = vdwg.mxu0
    %161 = vst [vmem:[#allocation7] sm:$0xff] %v112
    %162 = vst [vmem:[#allocation7 + $0x8] sm:$0xff] %v114
    %vm163 = vcmask 523264
    %164 = vst.msk [vmem:[#allocation7 + $0x10] sm:$0xff] %vm163, %v155
    %165 = vst [vmem:[#allocation7 + $0x18] sm:$0xff] %v116
    %166 = vst [vmem:[#allocation7 + $0x20] sm:$0xff] %v118
    %167 = vst.msk [vmem:[#allocation7 + $0x28] sm:$0xff] %vm163, %v158
    %v168 = vunpack.c.l.bf16 %v39
    %v169 = vunpack.c.h.bf16 %v39
    %v170 = vunpack.c.l.bf16 %v40
    %v171 = vunpack.c.h.bf16 %v40
    %172 = vst [vmem:[#allocation4] sm:$0xff] %v168
    %vm173 = vcmask 261120
    %174 = vst.msk [vmem:[#allocation4 + $0x8] sm:$0xff] %vm173, %v169
    %175 = vst [vmem:[#allocation4 + $0x20] sm:$0xff] %v170
    %176 = vst.msk [vmem:[#allocation4 + $0x28] sm:$0xff] %vm173, %v171
    %183 = vrot.lane.b32.xlu0 %v112, 32
    %v184 = vpop.permute.xlu0 %183
    %185 = vrot.lane.b32.xlu0 %v114, 32
    %v186 = vpop.permute.xlu0 %185
    %187 = vrot.lane.b32.xlu0 %v155, 32
    %v188 = vpop.permute.xlu0 %187
    %189 = vrot.lane.b32.xlu0 %v116, 32
    %v190 = vpop.permute.xlu0 %189
    %191 = vrot.lane.b32.xlu0 %v118, 32
    %v192 = vpop.permute.xlu0 %191
    %193 = vrot.lane.b32.xlu0 %v158, 32
    %v194 = vpop.permute.xlu0 %193
    %v195 = vsel %vm173, %v184, %v186
    %v196 = vsel %vm173, %v186, %v188
    %v197 = vsel %vm173, %v190, %v192
    %v198 = vsel %vm173, %v192, %v194
    %vm205 = vcmask 1047808
    %206 = vst.msk [vmem:[#allocation4 + $0x8] sm:$0xff] %vm205, %v184
    %207 = vst [vmem:[#allocation4 + $0x10] sm:$0xff] %v195
    %vm208 = vcmask 785408
    %209 = vst.msk [vmem:[#allocation4 + $0x18] sm:$0xff] %vm208, %v196
    %210 = vst.msk [vmem:[#allocation4 + $0x28] sm:$0xff] %vm205, %v190
    %211 = vst [vmem:[#allocation4 + $0x30] sm:$0xff] %v197
    %212 = vst.msk [vmem:[#allocation4 + $0x38] sm:$0xff] %vm208, %v198
    %v213 = vld [vmem:[%s3] sm:$0xf]
    %v214 = vld [vmem:[%s3 + $0x4] sm:$0xf]
    %v215 = vld [vmem:[%s3 + $0x8] sm:$0xf]
    %v216 = vld [vmem:[%s3 + $0xc] sm:$0xf]
    %v217 = vld [vmem:[%s3 + $0x10] sm:$0xf]
    %v218 = vld [vmem:[%s3 + $0x14] sm:$0xf]
    %v219 = vld [vmem:[%s3 + $0x18] sm:$0xf]
    %v220 = vld [vmem:[%s3 + $0x1c] sm:$0xf]
    %v221 = vld [vmem:[%s3 + $0x20] sm:$0xf]
    %v222 = vld [vmem:[%s3 + $0x24] sm:$0xf]
    %v223 = vld [vmem:[%s3 + $0x28] sm:$0xf]
    %v224 = vld [vmem:[%s3 + $0x2c] sm:$0xf]
    %v225 = vld [vmem:[%s3 + $0x30] sm:$0xf]
    %v226 = vld [vmem:[%s3 + $0x34] sm:$0xf]
    %v227 = vld [vmem:[%s3 + $0x38] sm:$0xf]
    %v228 = vld [vmem:[%s3 + $0x3c] sm:$0xf]
    %v229 = vld [vmem:[%s3 + $0x40] sm:$0xf]
    %v230 = vld [vmem:[%s3 + $0x44] sm:$0xf]
    %v231 = vld [vmem:[%s3 + $0x48] sm:$0xf]
    %v232 = vld [vmem:[%s3 + $0x4c] sm:$0xf]
    %v233 = vld [vmem:[%s4] sm:$0xf]
    %v234 = vld [vmem:[%s4 + $0x4] sm:$0x1]
    %v237 = vunpack.c.l.b16 %v233
    %v238 = vunpack.c.l.b16 %v234
    %v239 = vpack.c.b16 %v238, %v237
    %v241 = vsel %vm67, %v239, 0
    %243 = vmatprep.subr.bf16.mxu0 0
    %244 = vmatpush1.bf16.msra.mxu0 %v241
    %245 = vmatprep.subr.bf16.mxu0 0
    %246 = vmatpush1.bf16.msra.mxu0 0
    %247 = vmatprep.subr.bf16.mxu0 0
    %248 = vmatpush1.bf16.msra.mxu0 0
    %249 = vmatprep.subr.bf16.mxu0 0
    %250 = vmatpush1.bf16.msra.mxu0 0
    %251 = vmatprep.subr.bf16.mxu0 0
    %252 = vmatpush1.bf16.msra.mxu0 0
    %253 = vmatprep.subr.bf16.mxu0 0
    %254 = vmatpush1.bf16.msra.mxu0 0
    %255 = vmatprep.subr.bf16.mxu0 0
    %256 = vmatpush1.bf16.msra.mxu0 0
    %257 = vmatprep.subr.bf16.mxu0 0
    %258 = vmatpush1.bf16.msra.mxu0 0
    %259 = vmatprep.subr.bf16.mxu0 0
    %260 = vmatpush1.bf16.msra.mxu0 0
    %261 = vmatprep.subr.bf16.mxu0 0
    %262 = vmatpush1.bf16.msra.mxu0 0
    %263 = vmatprep.subr.bf16.mxu0 0
    %264 = vmatpush1.bf16.msra.mxu0 0
    %265 = vmatprep.subr.bf16.mxu0 0
    %266 = vmatpush1.bf16.msra.mxu0 0
    %267 = vmatprep.subr.bf16.mxu0 0
    %268 = vmatpush1.bf16.msra.mxu0 0
    %269 = vmatprep.subr.bf16.mxu0 0
    %270 = vmatpush1.bf16.msra.mxu0 0
    %271 = vmatprep.subr.bf16.mxu0 0
    %272 = vmatpush1.bf16.msra.mxu0 0
    %273 = vmatprep.subr.bf16.mxu0 0
    %274 = vmatpush1.bf16.msra.mxu0 0
    %275 = vmatprep.mubr.bf16.mxu0 0
    %276 = vmatmul.mubr.bf16.gmra.mrb[0].mxu0 %v65
    %v277 = vpop.f32.mrb[0].mxu0
    %v278 = vadd.f32 0.0, %v277
    %v279 = vpop.f32.mrb[0].mxu0
    %v280 = vpop.f32.mrb[0].mxu0
    %v281 = vadd.f32 0.0, %v280
    %v282 = vpop.f32.mrb[0].mxu0
    %283 = vdwg.mxu0
    %v286 = vunpack.c.l.b16 %v39
    %v287 = vunpack.c.h.b16 %v39
    %v288 = vunpack.c.l.b16 %v40
    %v289 = vunpack.c.h.b16 %v40
    %v290 = vpack.c.b16 %v288, %v286
    %v291 = vpack.c.b16 %v289, %v287
    %v313 = vunpack.c.l.b16 %v213
    %v314 = vunpack.c.l.b16 %v214
    %v315 = vunpack.c.l.b16 %v215
    %v316 = vunpack.c.l.b16 %v216
    %v317 = vunpack.c.l.b16 %v217
    %v318 = vunpack.c.l.b16 %v218
    %v319 = vunpack.c.l.b16 %v219
    %v320 = vunpack.c.l.b16 %v220
    %v321 = vunpack.c.l.b16 %v221
    %v322 = vunpack.c.l.b16 %v222
    %v323 = vunpack.c.l.b16 %v223
    %v324 = vunpack.c.l.b16 %v224
    %v325 = vunpack.c.l.b16 %v225
    %v326 = vunpack.c.l.b16 %v226
    %v327 = vunpack.c.l.b16 %v227
    %v328 = vunpack.c.l.b16 %v228
    %v329 = vunpack.c.l.b16 %v229
    %v330 = vunpack.c.l.b16 %v230
    %v331 = vunpack.c.l.b16 %v231
    %v332 = vunpack.c.l.b16 %v232
    %v333 = vpack.c.b16 %v314, %v313
    %v334 = vpack.c.b16 %v316, %v315
    %v335 = vpack.c.b16 %v318, %v317
    %v336 = vpack.c.b16 %v320, %v319
    %v337 = vpack.c.b16 %v322, %v321
    %v338 = vpack.c.b16 %v324, %v323
    %v339 = vpack.c.b16 %v326, %v325
    %v340 = vpack.c.b16 %v328, %v327
    %v341 = vpack.c.b16 %v330, %v329
    %v342 = vpack.c.b16 %v332, %v331
    %v354 = vsel %vm173, %v291, 0
    %356 = vmatprep.subr.bf16.mxu0 0
    %357 = vmatpush1.bf16.msra.mxu0 %v333
    %358 = vmatprep.subr.bf16.mxu0 0
    %359 = vmatpush1.bf16.msra.mxu0 %v334
    %360 = vmatprep.subr.bf16.mxu0 0
    %361 = vmatpush1.bf16.msra.mxu0 %v335
    %362 = vmatprep.subr.bf16.mxu0 0
    %363 = vmatpush1.bf16.msra.mxu0 %v336
    %364 = vmatprep.subr.bf16.mxu0 0
    %365 = vmatpush1.bf16.msra.mxu0 %v337
    %366 = vmatprep.subr.bf16.mxu0 0
    %367 = vmatpush1.bf16.msra.mxu0 %v338
    %368 = vmatprep.subr.bf16.mxu0 0
    %369 = vmatpush1.bf16.msra.mxu0 %v339
    %370 = vmatprep.subr.bf16.mxu0 0
    %371 = vmatpush1.bf16.msra.mxu0 %v340
    %372 = vmatprep.subr.bf16.mxu0 0
    %373 = vmatpush1.bf16.msra.mxu0 %v341
    %374 = vmatprep.subr.bf16.mxu0 0
    %375 = vmatpush1.bf16.msra.mxu0 %v342
    %376 = vmatprep.subr.bf16.mxu0 0
    %377 = vmatpush1.bf16.msra.mxu0 0
    %378 = vmatprep.subr.bf16.mxu0 0
    %379 = vmatpush1.bf16.msra.mxu0 0
    %380 = vmatprep.subr.bf16.mxu0 0
    %381 = vmatpush1.bf16.msra.mxu0 0
    %382 = vmatprep.subr.bf16.mxu0 0
    %383 = vmatpush1.bf16.msra.mxu0 0
    %384 = vmatprep.subr.bf16.mxu0 0
    %385 = vmatpush1.bf16.msra.mxu0 0
    %386 = vmatprep.subr.bf16.mxu0 0
    %387 = vmatpush1.bf16.msra.mxu0 0
    %388 = vmatprep.mubr.bf16.mxu0 %v354
    %389 = vmatmul.mubr.bf16.gmra.mrb[0].mxu0 %v290
    %v390 = vpop.f32.mrb[0].mxu0
    %v391 = vadd.f32 %v278, %v390
    %v392 = vpop.f32.mrb[0].mxu0
    %v393 = vpop.f32.mrb[0].mxu0
    %v394 = vadd.f32 %v281, %v393
    %v395 = vpop.f32.mrb[0].mxu0
    %396 = vdwg.mxu0
    %v397 = vld [vmem:[%s5] sm:$0x1]
    %v399 = vlaneseq
    %v400 = vshrl.u32 %v399, 7
    %v401 = vsub.s32 0, %v400
    %v402 = vrot.slane %v397, %v401
    %v404 = vadd.f32 %v391, %v402
    %v405 = vadd.f32 %v394, %v402
    %v406 = vmax.f32 %v404, 0.0
    %v407 = vmax.f32 %v405, 0.0
    %408 = vst.msk [vmem:[#allocation6] sm:$0xff] %vm163, %v406
    %409 = vst.msk [vmem:[#allocation6 + $0x8] sm:$0xff] %vm163, %v407
    %v410 = vpack.c.bf16 %v407, %v406
    %v411 = vld [vmem:[%s6] sm:$0xf]
    %v412 = vld [vmem:[%s6 + $0x4] sm:$0xf]
    %v413 = vld [vmem:[%s6 + $0x8] sm:$0xf]
    %v414 = vld [vmem:[%s6 + $0xc] sm:$0xf]
    %v415 = vld [vmem:[%s6 + $0x10] sm:$0xf]
    %v416 = vld [vmem:[%s6 + $0x14] sm:$0xf]
    %v417 = vld [vmem:[%s6 + $0x18] sm:$0xf]
    %v418 = vld [vmem:[%s6 + $0x1c] sm:$0xf]
    %v419 = vld [vmem:[%s7] sm:$0x1]
    %v421 = vlaneseq
    %v422 = vshrl.u32 %v421, 7
    %v423 = vsub.s32 0, %v422
    %v424 = vrot.slane %v419, %v423
    %v434 = vunpack.c.l.b16 %v411
    %v435 = vunpack.c.l.b16 %v412
    %v436 = vunpack.c.l.b16 %v413
    %v437 = vunpack.c.l.b16 %v414
    %v438 = vunpack.c.l.b16 %v415
    %v439 = vunpack.c.l.b16 %v416
    %v440 = vunpack.c.l.b16 %v417
    %v441 = vunpack.c.l.b16 %v418
    %v442 = vpack.c.b16 %v435, %v434
    %v443 = vpack.c.b16 %v437, %v436
    %v444 = vpack.c.b16 %v439, %v438
    %v445 = vpack.c.b16 %v441, %v440
    %v451 = vsel %vm163, %v410, 0
    %453 = vmatprep.subr.bf16.mxu0 0
    %454 = vmatpush1.bf16.msra.mxu0 %v442
    %455 = vmatprep.subr.bf16.mxu0 0
    %456 = vmatpush1.bf16.msra.mxu0 %v443
    %457 = vmatprep.subr.bf16.mxu0 0
    %458 = vmatpush1.bf16.msra.mxu0 %v444
    %459 = vmatprep.subr.bf16.mxu0 0
    %460 = vmatpush1.bf16.msra.mxu0 %v445
    %461 = vmatprep.subr.bf16.mxu0 0
    %462 = vmatpush1.bf16.msra.mxu0 0
    %463 = vmatprep.subr.bf16.mxu0 0
    %464 = vmatpush1.bf16.msra.mxu0 0
    %465 = vmatprep.subr.bf16.mxu0 0
    %466 = vmatpush1.bf16.msra.mxu0 0
    %467 = vmatprep.subr.bf16.mxu0 0
    %468 = vmatpush1.bf16.msra.mxu0 0
    %469 = vmatprep.subr.bf16.mxu0 0
    %470 = vmatpush1.bf16.msra.mxu0 0
    %471 = vmatprep.subr.bf16.mxu0 0
    %472 = vmatpush1.bf16.msra.mxu0 0
    %473 = vmatprep.subr.bf16.mxu0 0
    %474 = vmatpush1.bf16.msra.mxu0 0
    %475 = vmatprep.subr.bf16.mxu0 0
    %476 = vmatpush1.bf16.msra.mxu0 0
    %477 = vmatprep.subr.bf16.mxu0 0
    %478 = vmatpush1.bf16.msra.mxu0 0
    %479 = vmatprep.subr.bf16.mxu0 0
    %480 = vmatpush1.bf16.msra.mxu0 0
    %481 = vmatprep.subr.bf16.mxu0 0
    %482 = vmatpush1.bf16.msra.mxu0 0
    %483 = vmatprep.subr.bf16.mxu0 0
    %484 = vmatpush1.bf16.msra.mxu0 0
    %485 = vmatprep.mubr.bf16.mxu0 0
    %486 = vmatmul.mubr.bf16.gmra.mrb[0].mxu0 %v451
    %v487 = vpop.f32.mrb[0].mxu0
    %v488 = vadd.f32 %v424, %v487
    %v489 = vpop.f32.mrb[0].mxu0
    %v490 = vpop.f32.mrb[0].mxu0
    %v491 = vadd.f32 %v424, %v490
    %v492 = vpop.f32.mrb[0].mxu0
    %493 = vdwg.mxu0
    %494 = vst.msk [vmem:[#allocation2] sm:$0xff] %vm63, %v488
    %495 = vst.msk [vmem:[#allocation2 + $0x8] sm:$0xff] %vm63, %v491
    // Predicated region
    $region34: #{tpu_custom_call.1} parent=1 // pred_check
      _
    $region35: #{tpu_custom_call.1} parent=1 // pred_check_branch
      %497 = sbr.rel (0) target = $region37
    $region36: #{tpu_custom_call.1} parent=1 // pred_region
      %s499 = ssub.s32 256, 256
      %500 = vsyncadd [#allocation3], %s499
      %s501 = sshll.u32 [#allocation2], 4
      %s502 = int_to_ptr.vmem [resolvable:$true] %s501
      %507 = dma.vmem_to_hbm [thread:$0]  %s502, 256, %s8, [#allocation3], 128, 128, 8
    $region37: #{tpu_custom_call.1} parent=1 // pred_fallthru
      _
    // Predicated region
    $region38: #{tpu_custom_call.1} parent=1 // pred_check
      _
    $region39: #{tpu_custom_call.1} parent=1 // pred_check_branch
      %509 = sbr.rel (0) target = $region41
    $region40: #{tpu_custom_call.1} parent=1 // pred_region
      %s511 = ssub.s32 1024, 1024
      %512 = vsyncadd [#allocation5], %s511
      %s513 = sshll.u32 [#allocation4], 4
      %s514 = int_to_ptr.vmem [resolvable:$true] %s513
      %519 = dma.vmem_to_hbm [thread:$0]  %s514, 1024, %s9, [#allocation5], 512, 512, 32
    $region41: #{tpu_custom_call.1} parent=1 // pred_fallthru
      _
    // Predicated region
    $region42: #{tpu_custom_call.1} parent=1 // pred_check
      _
    $region43: #{tpu_custom_call.1} parent=1 // pred_check_branch
      %521 = sbr.rel (0) target = $region45
    $region44: #{tpu_custom_call.1} parent=1 // pred_region
      %s523 = ssub.s32 256, 256
      %524 = vsyncadd [#allocation5], %s523
      %s525 = sshll.u32 [#allocation6], 4
      %s526 = int_to_ptr.vmem [resolvable:$true] %s525
      %531 = dma.vmem_to_hbm [thread:$0]  %s526, 256, %s10, [#allocation5], 128, 128, 8
    $region45: #{tpu_custom_call.1} parent=1 // pred_fallthru
      _
    // Predicated region
    $region46: #{tpu_custom_call.1} parent=1 // pred_check
      _
    $region47: #{tpu_custom_call.1} parent=1 // pred_check_branch
      %533 = sbr.rel (0) target = $region49
    $region48: #{tpu_custom_call.1} parent=1 // pred_region
      %s535 = ssub.s32 768, 768
      %536 = vsyncadd [#allocation8], %s535
      %s537 = sshll.u32 [#allocation7], 4
      %s538 = int_to_ptr.vmem [resolvable:$true] %s537
      %543 = dma.vmem_to_hbm [thread:$0]  %s538, 768, %s11, [#allocation8], 384, 384, 24
    $region49: #{tpu_custom_call.1} parent=1 // pred_fallthru
      _
    // Predicated region
    $region50: #{tpu_custom_call.1} parent=1 // pred_check
      _
    $region51: #{tpu_custom_call.1} parent=1 // pred_check_branch
      %545 = sbr.rel (0) target = $region53
    $region52: #{tpu_custom_call.1} parent=1 // pred_region
      %546 = dma.done [#allocation3], 256
    $region53: #{tpu_custom_call.1} parent=1 // pred_fallthru
      _
    // Predicated region
    $region54: #{tpu_custom_call.1} parent=1 // pred_check
      _
    $region55: #{tpu_custom_call.1} parent=1 // pred_check_branch
      %548 = sbr.rel (0) target = $region57
    $region56: #{tpu_custom_call.1} parent=1 // pred_region
      %549 = dma.done [#allocation5], 1024
    $region57: #{tpu_custom_call.1} parent=1 // pred_fallthru
      _
    // Predicated region
    $region58: #{tpu_custom_call.1} parent=1 // pred_check
      _
    $region59: #{tpu_custom_call.1} parent=1 // pred_check_branch
      %551 = sbr.rel (0) target = $region61
    $region60: #{tpu_custom_call.1} parent=1 // pred_region
      %552 = dma.done [#allocation5], 256
    $region61: #{tpu_custom_call.1} parent=1 // pred_fallthru
      _
    // Predicated region
    $region62: #{tpu_custom_call.1} parent=1 // pred_check
      _
    $region63: #{tpu_custom_call.1} parent=1 // pred_check_branch
      %554 = sbr.rel (0) target = $region65
    $region64: #{tpu_custom_call.1} parent=1 // pred_region
      %555 = dma.done [#allocation8], 768
    $region65: #{tpu_custom_call.1} parent=1 // pred_fallthru
      _
    %556 = vsyncpa [#allocation3], 1
    %557 = vsyncpa [#allocation5], 1
    %558 = vsyncpa [#allocation8], 1

</llo_original>
